<compile_context>
chip_gen: v6e
topology: v6e:2x2x1
jax: 0.10.0
libtpu: 0.0.40
codegen_flags: <defaults>
</compile_context>

<pallas_src>
import functools

import jax
import jax.numpy as jnp
from jax.experimental import pallas as pl
from jax.experimental.pallas import tpu as pltpu

_LANES = 128
_MAX_ROWS = 2048  # sublane rows per grid step (multiple of 8) for large images


def _round_up(a, b):
    return ((a + b - 1) // b) * b


def _project3d_kernel(p_ref, pts_ref, out_ref, *, eps, bb):
    # p_ref:   (B*12,) f32 in SMEM — rows of P=(K@T)[:3,:] (sx/sy pre-folded).
    # pts_ref: (bb, 4, r, 128)     — homogeneous 3D points tile.
    # out_ref: (bb, 2, r, 128)     — normalized pixel coordinate planes.
    g = pl.program_id(0)
    for i in range(bb):  # static unroll over batch elements in this block
        base = (g * bb + i) * 12

        x = pts_ref[i, 0]  # (r, 128)
        y = pts_ref[i, 1]
        z = pts_ref[i, 2]
        w = pts_ref[i, 3]

        # 12 scalar-broadcast VPU FMAs (no MXU round-trip for a 3x4 matmul).
        cam_x = (p_ref[base + 0] * x + p_ref[base + 1] * y
                 + p_ref[base + 2] * z + p_ref[base + 3] * w)
        cam_y = (p_ref[base + 4] * x + p_ref[base + 5] * y
                 + p_ref[base + 6] * z + p_ref[base + 7] * w)
        cam_z = (p_ref[base + 8] * x + p_ref[base + 9] * y
                 + p_ref[base + 10] * z + p_ref[base + 11] * w)

        # EUP reciprocal + one Newton step (keeps the 1e-4 tolerance easily,
        # and frees the VALU slot on v7x's higher per-TC HBM bandwidth).
        zc = cam_z + eps
        inv = pl.reciprocal(zc, approx=True)
        inv = inv * (2.0 - zc * inv)

        out_ref[i, 0] = (cam_x * inv - 1.0).astype(out_ref.dtype)
        out_ref[i, 1] = (cam_y * inv - 1.0).astype(out_ref.dtype)


def project3d(points, K, T, *, batch_size, height, width, eps=1e-7,
              max_rows=_MAX_ROWS, channels_last=True):
    """points: [B, 4, H*W], K: [B, 4, 4], T: [B, 4, 4] -> [B, H, W, 2]."""
    B, four, N = points.shape
    assert four == 4 and B == batch_size and N == height * width

    # Glue: tiny per-batch 4x4 matmul. Fold the pixel normalization scales into
    # P (48 bytes per batch element — NOT the data stream).
    sx = 2.0 / (float(width) - 1.0)   # folds /(W-1), -0.5, *2
    sy = 2.0 / (float(height) - 1.0)  # folds /(H-1), -0.5, *2
    P = jnp.matmul(K, T)[:, :3, :]                                  # [B, 3, 4]
    scale = jnp.array([sx, sy, 1.0], dtype=jnp.float32).reshape(1, 3, 1)
    p_flat = (P.astype(jnp.float32) * scale).reshape(B * 12)        # 1-D SMEM

    # ---- Tiling decisions (all trace-time Python) --------------------------
    R = -(-N // _LANES)  # ceil(N / 128): sublane rows per batch element

    if R <= max_rows:
        if B == 1 and R >= 16:
            # Single batch element: split rows into 2 tiles so the grid has
            # >= 2 steps for v7x megacore sharding.
            r_pad = _round_up(R, 16)
            r = r_pad // 2
            bb = 1
        else:
            r_pad = R
            r = R  # block equals full trailing extent (no multiple-of-8 need)
            # Many tiny images per batch: pack several batch elements per grid
            # step so each DMA moves ~>= 0.5 MiB, but keep >= 2 grid steps.
            bytes_per_batch = 4 * R * _LANES * points.dtype.itemsize
            target_bb = max(1, (512 * 1024) // max(1, bytes_per_batch))
            target_bb = min(target_bb, max(1, B // 2))
            bb = 1
            for d in range(1, B + 1):
                if B % d == 0 and d <= target_bb:
                    bb = d
    else:
        # Large images: pick r as a multiple of 8 dividing round_up(R, 8) to
        # avoid extra row padding; fall back to max_rows tiles if the best
        # divisor is too small to amortize per-step overhead.
        R8 = _round_up(R, 8)
        r = 8
        for cand in range(max_rows, 7, -8):
            if R8 % cand == 0:
                r = cand
                break
        if r < 256:
            r = max_rows
            r_pad = _round_up(R, r)
        else:
            r_pad = R8
        bb = 1

    # ---- Single zero-padding pass on the flat axis, then free reshape ------
    total = r_pad * _LANES
    if total != N:
        pts = jnp.pad(points, ((0, 0), (0, 0), (0, total - N)))
    else:
        pts = points
    pts4 = pts.reshape(B, 4, r_pad, _LANES)

    kernel = functools.partial(_project3d_kernel, eps=float(eps), bb=bb)

    itemsize = points.dtype.itemsize
    cost = pl.CostEstimate(
        flops=30 * B * total,
        transcendentals=B * total,
        bytes_accessed=B * total * (4 + 2) * itemsize,
    )

    out4 = pl.pallas_call(
        kernel,
        out_shape=jax.ShapeDtypeStruct((B, 2, r_pad, _LANES), points.dtype),
        grid_spec=pltpu.PrefetchScalarGridSpec(
            num_scalar_prefetch=0,
            grid=(B // bb, r_pad // r),
            in_specs=[
                # P coefficients: whole flat (B*12,) table resident in SMEM.
                pl.BlockSpec(memory_space=pltpu.MemorySpace.SMEM),
                # Points: sublane-dense (bb, 4, r, 128) tile per step.
                pl.BlockSpec((bb, 4, r, _LANES), lambda g, n: (g, 0, n, 0)),
            ],
            out_specs=pl.BlockSpec((bb, 2, r, _LANES), lambda g, n: (g, 0, n, 0)),
        ),
        compiler_params=pltpu.CompilerParams(
            dimension_semantics=("parallel", "parallel"),
        ),
        cost_estimate=cost,
    )(p_flat, pts4)

    # Glue: [B, 2, r_pad, 128] -> [B, 2, N] -> [B, 2, H, W].
    pix = out4.reshape(B, 2, total)[:, :, :N].reshape(B, 2, height, width)
    if not channels_last:
        return pix  # channel-first: avoids an extra full HBM pass
    # Module contract is channel-last; this permute is a separate XLA pass and
    # dominates the remaining cost — prefer channels_last=False when possible.
    return pix.transpose(0, 2, 3, 1)


def _project3d_reference(points, K, T, *, batch_size, height, width, eps=1e-7):
    P = jnp.matmul(K, T)[:, :3, :]
    cam = jnp.matmul(P, points)
    pix = cam[:, :2, :] / (cam[:, 2:3, :] + eps)
    pix = pix.reshape(batch_size, 2, height, width).transpose(0, 2, 3, 1)
    pix = pix.at[..., 0].divide(width - 1)
    pix = pix.at[..., 1].divide(height - 1)
    return (pix - 0.5) * 2.0


def _make_inputs(key, batch_size, height, width):
    N = height * width
    k_pts, k_t = jax.random.split(key, 2)

    xyz = jax.random.normal(k_pts, (batch_size, 3, N), dtype=jnp.float32)
    xyz = xyz + jnp.array([0.0, 0.0, 3.0], dtype=jnp.float32).reshape(1, 3, 1)
    ones = jnp.ones((batch_size, 1, N), dtype=jnp.float32)
    points = jnp.concatenate([xyz, ones], axis=1)

    K = jnp.tile(
        jnp.array(
            [[width * 0.5, 0.0, width * 0.5, 0.0],
             [0.0, height * 0.5, height * 0.5, 0.0],
             [0.0, 0.0, 1.0, 0.0],
             [0.0, 0.0, 0.0, 1.0]],
            dtype=jnp.float32,
        )[None],
        (batch_size, 1, 1),
    )
    T = jnp.eye(4, dtype=jnp.float32)[None] + 0.01 * jax.random.normal(
        k_t, (batch_size, 4, 4), dtype=jnp.float32
    )
    return points, K, T


if __name__ == "__main__":
    key = jax.random.PRNGKey(0)
    k1, k2, k3 = jax.random.split(key, 3)

    # Case 1: canonical small test (N = 256 -> 2 lane-rows, one step per batch).
    bs, h, w = 2, 16, 16
    points, K, T = _make_inputs(k1, bs, h, w)
    out = project3d(points, K, T, batch_size=bs, height=h, width=w)
    out = jax.block_until_ready(out)
    ref = _project3d_reference(points, K, T, batch_size=bs, height=h, width=w)
    assert out.shape == (bs, h, w, 2)
    assert jnp.allclose(out, ref, atol=1e-4, rtol=1e-4)

    # Case 2: H*W not a multiple of 128 (exercises the single-pad path).
    bs2, h2, w2 = 2, 12, 20
    points2, K2, T2 = _make_inputs(k2, bs2, h2, w2)
    out2 = project3d(points2, K2, T2, batch_size=bs2, height=h2, width=w2)
    out2 = jax.block_until_ready(out2)
    ref2 = _project3d_reference(points2, K2, T2, batch_size=bs2, height=h2, width=w2)
    assert out2.shape == (bs2, h2, w2, 2)
    assert jnp.allclose(out2, ref2, atol=1e-4, rtol=1e-4)

    # Case 3: single batch, larger image (exercises the B==1 row-split path).
    bs3, h3, w3 = 1, 32, 64
    points3, K3, T3 = _make_inputs(k3, bs3, h3, w3)
    out3 = project3d(points3, K3, T3, batch_size=bs3, height=h3, width=w3)
    out3 = jax.block_until_ready(out3)
    ref3 = _project3d_reference(points3, K3, T3, batch_size=bs3, height=h3, width=w3)
    assert out3.shape == (bs3, h3, w3, 2)
    assert jnp.allclose(out3, ref3, atol=1e-4, rtol=1e-4)

    print("KERNEL_OK")
</pallas_src>

<mosaic_0001>
module attributes {stable_mosaic.version = 11 : i64} {
  func.func @_project3d_kernel(%arg0: i32, %arg1: i32, %arg2: memref<24xf32, #tpu.memory_space<smem>>, %arg3: memref<1x4x2x128xf32, #tpu.memory_space<vmem>>, %arg4: memref<1x2x2x128xf32, #tpu.memory_space<vmem>>) attributes {dimension_semantics = [#tpu.dimension_semantics<parallel>, #tpu.dimension_semantics<parallel>], iteration_bounds = array<i64: 2, 1>, scalar_prefetch = 0 : i64, scratch_operands = 0 : i64, tpu.core_type = #tpu.core_type<tc>, window_params = [{transform_indices = @transform_0, window_bounds = array<i64: 24>}, {transform_indices = @transform_1, window_bounds = array<i64: 1, 4, 2, 128>}, {transform_indices = @transform_2, window_bounds = array<i64: 1, 2, 2, 128>}]} {
    %c1_i32 = arith.constant 1 : i32
    %0 = arith.muli %arg0, %c1_i32 : i32
    %c0_i32 = arith.constant 0 : i32
    %1 = arith.addi %0, %c0_i32 : i32
    %c12_i32 = arith.constant 12 : i32
    %2 = arith.muli %1, %c12_i32 : i32
    %c0 = arith.constant 0 : index
    %c0_0 = arith.constant 0 : index
    %c0_1 = arith.constant 0 : index
    %c0_2 = arith.constant 0 : index
    %3 = vector.load %arg3[%c0, %c0_0, %c0_1, %c0_2] : memref<1x4x2x128xf32, #tpu.memory_space<vmem>>, vector<1x1x2x128xf32>
    %4 = vector.shape_cast %3 : vector<1x1x2x128xf32> to vector<2x128xf32>
    %c0_3 = arith.constant 0 : index
    %c1 = arith.constant 1 : index
    %c0_4 = arith.constant 0 : index
    %c0_5 = arith.constant 0 : index
    %5 = vector.load %arg3[%c0_3, %c1, %c0_4, %c0_5] : memref<1x4x2x128xf32, #tpu.memory_space<vmem>>, vector<1x1x2x128xf32>
    %6 = vector.shape_cast %5 : vector<1x1x2x128xf32> to vector<2x128xf32>
    %c0_6 = arith.constant 0 : index
    %c2 = arith.constant 2 : index
    %c0_7 = arith.constant 0 : index
    %c0_8 = arith.constant 0 : index
    %7 = vector.load %arg3[%c0_6, %c2, %c0_7, %c0_8] : memref<1x4x2x128xf32, #tpu.memory_space<vmem>>, vector<1x1x2x128xf32>
    %8 = vector.shape_cast %7 : vector<1x1x2x128xf32> to vector<2x128xf32>
    %c0_9 = arith.constant 0 : index
    %c3 = arith.constant 3 : index
    %c0_10 = arith.constant 0 : index
    %c0_11 = arith.constant 0 : index
    %9 = vector.load %arg3[%c0_9, %c3, %c0_10, %c0_11] : memref<1x4x2x128xf32, #tpu.memory_space<vmem>>, vector<1x1x2x128xf32>
    %10 = vector.shape_cast %9 : vector<1x1x2x128xf32> to vector<2x128xf32>
    %c0_i32_12 = arith.constant 0 : i32
    %11 = arith.addi %2, %c0_i32_12 : i32
    %12 = arith.index_cast %11 : i32 to index
    %13 = memref.load %arg2[%12] : memref<24xf32, #tpu.memory_space<smem>>
    %14 = vector.broadcast %13 : f32 to vector<2x128xf32>
    %15 = arith.mulf %14, %4 : vector<2x128xf32>
    %c1_i32_13 = arith.constant 1 : i32
    %16 = arith.addi %2, %c1_i32_13 : i32
    %17 = arith.index_cast %16 : i32 to index
    %18 = memref.load %arg2[%17] : memref<24xf32, #tpu.memory_space<smem>>
    %19 = vector.broadcast %18 : f32 to vector<2x128xf32>
    %20 = arith.mulf %19, %6 : vector<2x128xf32>
    %21 = arith.addf %15, %20 : vector<2x128xf32>
    %c2_i32 = arith.constant 2 : i32
    %22 = arith.addi %2, %c2_i32 : i32
    %23 = arith.index_cast %22 : i32 to index
    %24 = memref.load %arg2[%23] : memref<24xf32, #tpu.memory_space<smem>>
    %25 = vector.broadcast %24 : f32 to vector<2x128xf32>
    %26 = arith.mulf %25, %8 : vector<2x128xf32>
    %27 = arith.addf %21, %26 : vector<2x128xf32>
    %c3_i32 = arith.constant 3 : i32
    %28 = arith.addi %2, %c3_i32 : i32
    %29 = arith.index_cast %28 : i32 to index
    %30 = memref.load %arg2[%29] : memref<24xf32, #tpu.memory_space<smem>>
    %31 = vector.broadcast %30 : f32 to vector<2x128xf32>
    %32 = arith.mulf %31, %10 : vector<2x128xf32>
    %33 = arith.addf %27, %32 : vector<2x128xf32>
    %c4_i32 = arith.constant 4 : i32
    %34 = arith.addi %2, %c4_i32 : i32
    %35 = arith.index_cast %34 : i32 to index
    %36 = memref.load %arg2[%35] : memref<24xf32, #tpu.memory_space<smem>>
    %37 = vector.broadcast %36 : f32 to vector<2x128xf32>
    %38 = arith.mulf %37, %4 : vector<2x128xf32>
    %c5_i32 = arith.constant 5 : i32
    %39 = arith.addi %2, %c5_i32 : i32
    %40 = arith.index_cast %39 : i32 to index
    %41 = memref.load %arg2[%40] : memref<24xf32, #tpu.memory_space<smem>>
    %42 = vector.broadcast %41 : f32 to vector<2x128xf32>
    %43 = arith.mulf %42, %6 : vector<2x128xf32>
    %44 = arith.addf %38, %43 : vector<2x128xf32>
    %c6_i32 = arith.constant 6 : i32
    %45 = arith.addi %2, %c6_i32 : i32
    %46 = arith.index_cast %45 : i32 to index
    %47 = memref.load %arg2[%46] : memref<24xf32, #tpu.memory_space<smem>>
    %48 = vector.broadcast %47 : f32 to vector<2x128xf32>
    %49 = arith.mulf %48, %8 : vector<2x128xf32>
    %50 = arith.addf %44, %49 : vector<2x128xf32>
    %c7_i32 = arith.constant 7 : i32
    %51 = arith.addi %2, %c7_i32 : i32
    %52 = arith.index_cast %51 : i32 to index
    %53 = memref.load %arg2[%52] : memref<24xf32, #tpu.memory_space<smem>>
    %54 = vector.broadcast %53 : f32 to vector<2x128xf32>
    %55 = arith.mulf %54, %10 : vector<2x128xf32>
    %56 = arith.addf %50, %55 : vector<2x128xf32>
    %c8_i32 = arith.constant 8 : i32
    %57 = arith.addi %2, %c8_i32 : i32
    %58 = arith.index_cast %57 : i32 to index
    %59 = memref.load %arg2[%58] : memref<24xf32, #tpu.memory_space<smem>>
    %60 = vector.broadcast %59 : f32 to vector<2x128xf32>
    %61 = arith.mulf %60, %4 : vector<2x128xf32>
    %c9_i32 = arith.constant 9 : i32
    %62 = arith.addi %2, %c9_i32 : i32
    %63 = arith.index_cast %62 : i32 to index
    %64 = memref.load %arg2[%63] : memref<24xf32, #tpu.memory_space<smem>>
    %65 = vector.broadcast %64 : f32 to vector<2x128xf32>
    %66 = arith.mulf %65, %6 : vector<2x128xf32>
    %67 = arith.addf %61, %66 : vector<2x128xf32>
    %c10_i32 = arith.constant 10 : i32
    %68 = arith.addi %2, %c10_i32 : i32
    %69 = arith.index_cast %68 : i32 to index
    %70 = memref.load %arg2[%69] : memref<24xf32, #tpu.memory_space<smem>>
    %71 = vector.broadcast %70 : f32 to vector<2x128xf32>
    %72 = arith.mulf %71, %8 : vector<2x128xf32>
    %73 = arith.addf %67, %72 : vector<2x128xf32>
    %c11_i32 = arith.constant 11 : i32
    %74 = arith.addi %2, %c11_i32 : i32
    %75 = arith.index_cast %74 : i32 to index
    %76 = memref.load %arg2[%75] : memref<24xf32, #tpu.memory_space<smem>>
    %77 = vector.broadcast %76 : f32 to vector<2x128xf32>
    %78 = arith.mulf %77, %10 : vector<2x128xf32>
    %79 = arith.addf %73, %78 : vector<2x128xf32>
    %cst = arith.constant 1.000000e-07 : f32
    %80 = vector.broadcast %cst : f32 to vector<2x128xf32>
    %81 = arith.addf %79, %80 : vector<2x128xf32>
    %82 = tpu.reciprocal %81 {approx = true} : vector<2x128xf32> -> vector<2x128xf32>
    %83 = arith.mulf %81, %82 : vector<2x128xf32>
    %cst_14 = arith.constant 2.000000e+00 : f32
    %84 = vector.broadcast %cst_14 : f32 to vector<2x128xf32>
    %85 = arith.subf %84, %83 : vector<2x128xf32>
    %86 = arith.mulf %82, %85 : vector<2x128xf32>
    %87 = arith.mulf %33, %86 : vector<2x128xf32>
    %cst_15 = arith.constant 1.000000e+00 : f32
    %88 = vector.broadcast %cst_15 : f32 to vector<2x128xf32>
    %89 = arith.subf %87, %88 : vector<2x128xf32>
    %c0_16 = arith.constant 0 : index
    %c0_17 = arith.constant 0 : index
    %c0_18 = arith.constant 0 : index
    %c0_19 = arith.constant 0 : index
    %90 = vector.load %arg4[%c0_16, %c0_17, %c0_18, %c0_19] : memref<1x2x2x128xf32, #tpu.memory_space<vmem>>, vector<1x1x2x128xf32>
    %91 = vector.shape_cast %90 : vector<1x1x2x128xf32> to vector<2x128xf32>
    %92 = vector.shape_cast %89 : vector<2x128xf32> to vector<1x1x2x128xf32>
    tpu.vector_store %arg4[%c0_16, %c0_17, %c0_18, %c0_19], %92 {strides = array<i32>} : memref<1x2x2x128xf32, #tpu.memory_space<vmem>>, vector<1x1x2x128xf32>,
    %93 = arith.mulf %56, %86 : vector<2x128xf32>
    %cst_20 = arith.constant 1.000000e+00 : f32
    %94 = vector.broadcast %cst_20 : f32 to vector<2x128xf32>
    %95 = arith.subf %93, %94 : vector<2x128xf32>
    %c0_21 = arith.constant 0 : index
    %c1_22 = arith.constant 1 : index
    %c0_23 = arith.constant 0 : index
    %c0_24 = arith.constant 0 : index
    %96 = vector.load %arg4[%c0_21, %c1_22, %c0_23, %c0_24] : memref<1x2x2x128xf32, #tpu.memory_space<vmem>>, vector<1x1x2x128xf32>
    %97 = vector.shape_cast %96 : vector<1x1x2x128xf32> to vector<2x128xf32>
    %98 = vector.shape_cast %95 : vector<2x128xf32> to vector<1x1x2x128xf32>
    tpu.vector_store %arg4[%c0_21, %c1_22, %c0_23, %c0_24], %98 {strides = array<i32>} : memref<1x2x2x128xf32, #tpu.memory_space<vmem>>, vector<1x1x2x128xf32>,
    return
  }
  func.func @transform_0(%arg0: i32, %arg1: i32) -> i32 {
    %c0_i32 = arith.constant 0 : i32
    %c0_i32_0 = arith.constant 0 : i32
    return %c0_i32 : i32
  }
  func.func @transform_1(%arg0: i32, %arg1: i32) -> (i32, i32, i32, i32) {
    %c0_i32 = arith.constant 0 : i32
    %c0_i32_0 = arith.constant 0 : i32
    %c0_i32_1 = arith.constant 0 : i32
    return %arg0, %c0_i32, %arg1, %c0_i32_0 : i32, i32, i32, i32
  }
  func.func @transform_2(%arg0: i32, %arg1: i32) -> (i32, i32, i32, i32) {
    %c0_i32 = arith.constant 0 : i32
    %c0_i32_0 = arith.constant 0 : i32
    %c0_i32_1 = arith.constant 0 : i32
    return %arg0, %c0_i32, %arg1, %c0_i32_0 : i32, i32, i32, i32
  }
}

</mosaic_0001>

<llo_original>
// kernel: tpu_custom_call.1
$region0: #{tpu_custom_call.1}
  #allocation0 [shape = 'u32[]', space=smem, size = 0x4, offset = 0x4, fixed_abs, tag = 'smem constant byte address 0x4 - core index']
  #allocation1 [shape = 'u32[144,128]{1,0:T(1,128)}', space=vmem, size = 0x12000, scoped, tag = 'internal scratch']
  %s0 = inlined_call_operand.hbm [shape: f32[24], index: 0, kind: input, shape index: {}]
  %s1 = inlined_call_operand.hbm [shape: f32[2,4,2,128], index: 1, kind: input, shape index: {}]
  %s2 = inlined_call_operand.hbm [shape: f32[2,2,2,128], index: 2, kind: output, shape index: {}]
  %s3 = sld [smem:[#allocation0]]
  $region49: #{tpu_custom_call.1} parent=0
    _
  %s5 = ssub.s32 1, %s3
  %s6 = scalar_select 0, %s5, %s3
  $region1: #{tpu_custom_call.1} parent=0
    #allocation2 [shape = 'u8[512]{0}', space=smem, size = 0x200, scoped, tag = 'input window, operand 0, single buffered']
    #allocation3 [shape = 's32[2]{0}', space=sflag, size = 0x8, scoped, tag = 'scoped memory for tpu_custom_call.1']
    #allocation4 [shape = 's32[2]{0}', space=sflag, size = 0x8, scoped, tag = 'scoped memory for tpu_custom_call.1']
    #allocation5 [shape = 's32[2]{0}', space=sflag, size = 0x8, scoped, tag = 'scoped memory for tpu_custom_call.1']
    #allocation6 [shape = 'u8[8192]{0}', space=vmem, size = 0x2000, scoped, tag = 'input window, operand 1']
    #allocation7 [shape = 'u8[4096]{0}', space=vmem, size = 0x1000, scoped, tag = 'output window, operand 0']
    %7 = vsyncpa [#allocation5], 0
    %8 = vsyncpa [#allocation3], 0
    %s9 = scalar_lea.sflag [#allocation3], 1
    %10 = vsyncpa %s9, 0
    %11 = vsyncpa [#allocation4], 0
    %s12 = scalar_lea.sflag [#allocation4], 1
    %13 = vsyncpa %s12, 0
    loop: start=0, step=1, limit=4
    $region2: #{tpu_custom_call.1} parent=1 // loop_pre_header
      _
    $region3: #{tpu_custom_call.1} parent=1 // loop_header
      %s15 = sphi 0, %s19
      %p16 = scmp.ge.s32.totalorder %s15, 4
      %s22 = sphi 0, %s34
      %s23 = sphi 0, %s30
      %s24 = sphi 0, %s22
      %s25 = sphi 0, %s23
      %s26 = sphi 0, %s24
      %s27 = sphi 0, %s25
      %s35 = sphi 0, %s35
      %s37 = sphi 0, %s35
      %s38 = sphi 0, %s37
      %s52 = sphi 0, %s38
      %s60 = sphi 0, %s62
      %s63 = sphi 0, %s60
      %s64 = sphi 0, %s63
      %s80 = sphi 0, %s64
      %s88 = sphi 0, %s90
      %s91 = sphi 0, %s88
      %s92 = sphi 0, %s91
      %s108 = sphi 0, %s92
    $region4: #{tpu_custom_call.1} parent=1 // loop_header_branch
      %18 = sbr.rel (%p16) target = $region8
    $region5: #{tpu_custom_call.1} parent=1 // loop_body
      %s20 = ssub.s32 %s15, 1
      %s21 = ssub.s32 %s15, 2
      %s28 = sadd.s32 1, %s23
      %p29 = scmp.ge.s32.totalorder %s28, 1
      %s30 = scalar_select %p29, 0, %s28
      %s31 = sadd.s32 1, %s22
      %s32 = scalar_select %p29, %s31, %s22
      %p33 = scmp.ge.s32.totalorder %s32, 2
      %s34 = scalar_select %p33, 0, %s32
      %s36 = sadd.s32 %s35, 1
      %p39 = scmp.eq.s32.totalorder %s15, 1
      %p40 = scmp.ne.s32.totalorder %s35, %s37
      %p41 = scmp.eq.s32.totalorder %s15, 0
      %p42 = por %p40, %p41
      %p43 = scmp.ne.s32.totalorder %s35, %s37
      %p44 = scmp.eq.s32.totalorder %s20, 1
      %p45 = por %p43, %p44
      %p46 = scmp.ne.s32.totalorder %s37, %s38
      %p47 = scmp.eq.s32.totalorder %s20, 0
      %p48 = por %p46, %p47
      %p49 = scmp.ne.s32.totalorder %s37, %s38
      %p50 = scmp.eq.s32.totalorder %s21, 1
      %p51 = por %p49, %p50
      %p53 = scmp.ne.s32.totalorder %s38, %s52
      %p54 = scmp.eq.s32.totalorder %s21, 0
      %p55 = por %p53, %p54
      %s56 = ssub.s32 %s22, %s34
      %s57 = ssub.s32 %s23, %s30
      %s58 = sor.u32 %s56, %s57
      %p59 = scmp.eq.s32.totalorder %s58, 0
      %s61 = sadd.s32 %s60, 1
      %s62 = scalar_select %p59, %s60, %s61
      %p65 = pneg %p59
      %p66 = scmp.eq.s32.totalorder %s15, 1
      %p67 = por %p65, %p66
      %p68 = scmp.ne.s32.totalorder %s60, %s63
      %p69 = scmp.eq.s32.totalorder %s15, 0
      %p70 = por %p68, %p69
      %p71 = scmp.ne.s32.totalorder %s60, %s63
      %p72 = scmp.eq.s32.totalorder %s20, 1
      %p73 = por %p71, %p72
      %p74 = scmp.ne.s32.totalorder %s63, %s64
      %p75 = scmp.eq.s32.totalorder %s20, 0
      %p76 = por %p74, %p75
      %p77 = scmp.ne.s32.totalorder %s63, %s64
      %p78 = scmp.eq.s32.totalorder %s21, 1
      %p79 = por %p77, %p78
      %p81 = scmp.ne.s32.totalorder %s64, %s80
      %p82 = scmp.eq.s32.totalorder %s21, 0
      %p83 = por %p81, %p82
      %s84 = ssub.s32 %s22, %s34
      %s85 = ssub.s32 %s23, %s30
      %s86 = sor.u32 %s84, %s85
      %p87 = scmp.eq.s32.totalorder %s86, 0
      %s89 = sadd.s32 %s88, 1
      %s90 = scalar_select %p87, %s88, %s89
      %p93 = pneg %p87
      %p94 = scmp.eq.s32.totalorder %s15, 1
      %p95 = por %p93, %p94
      %p96 = scmp.ne.s32.totalorder %s88, %s91
      %p97 = scmp.eq.s32.totalorder %s15, 0
      %p98 = por %p96, %p97
      %p99 = scmp.ne.s32.totalorder %s88, %s91
      %p100 = scmp.eq.s32.totalorder %s20, 1
      %p101 = por %p99, %p100
      %p102 = scmp.ne.s32.totalorder %s91, %s92
      %p103 = scmp.eq.s32.totalorder %s20, 0
      %p104 = por %p102, %p103
      %p105 = scmp.ne.s32.totalorder %s91, %s92
      %p106 = scmp.eq.s32.totalorder %s21, 1
      %p107 = por %p105, %p106
      %p109 = scmp.ne.s32.totalorder %s92, %s108
      %p110 = scmp.eq.s32.totalorder %s21, 0
      %p111 = por %p109, %p110
      %p112 = scmp.le.s32.totalorder 1, %s15
      %p113 = scmp.lt.s32.totalorder %s15, 3
      %p114 = pnand %p112, %p113
      %p115 = pneg %p114
      // Predicated region
      $region9: #{tpu_custom_call.1} parent=5 // pred_check
        _
      $region10: #{tpu_custom_call.1} parent=5 // pred_check_branch
        %117 = sbr.rel (%p114) target = $region12
      $region11: #{tpu_custom_call.1} parent=5 // pred_region
        %s118 = ssub.s32 %s15, 1
        // Predicated region
        $region13: #{tpu_custom_call.1} parent=11 // pred_check
          %p119 = pneg %p48
        $region14: #{tpu_custom_call.1} parent=11 // pred_check_branch
          %121 = sbr.rel (%p119) target = $region16
        $region15: #{tpu_custom_call.1} parent=11 // pred_region
          %s123 = ssub.s32 16, 16
          %124 = vsyncadd [#allocation5], %s123
          %127 = dma.hbm_to_smem %s0, 16, [#allocation2], [#allocation5]
        $region16: #{tpu_custom_call.1} parent=11 // pred_fallthru
          _
      $region12: #{tpu_custom_call.1} parent=5 // pred_fallthru
        _
      %p128 = scmp.lt.s32.totalorder %s15, 2
      // Predicated region
      $region17: #{tpu_custom_call.1} parent=5 // pred_check
        %p129 = pneg %p128
      $region18: #{tpu_custom_call.1} parent=5 // pred_check_branch
        %131 = sbr.rel (%p129) target = $region20
      $region19: #{tpu_custom_call.1} parent=5 // pred_region
        // Predicated region
        $region21: #{tpu_custom_call.1} parent=19 // pred_check
          %p132 = pneg %p70
        $region22: #{tpu_custom_call.1} parent=19 // pred_check_branch
          %134 = sbr.rel (%p132) target = $region24
        $region23: #{tpu_custom_call.1} parent=19 // pred_region
          %s135 = sand.u32 %s60, 1
          %s136 = scalar_lea.sflag [#allocation3], %s135
          %s137 = sand.u32 %s60, 1
          %s138 = smul.addr %s137, 8
          %s139 = scalar_lea.vmem [#allocation6], %s138
          %s141 = ssub.s32 128, 128
          %142 = vsyncadd %s136, %s141
          %s143 = smul.addr %s22, 4
          %s144 = sadd.s32 %s23, %s143
          %s145 = smul.addr %s144, 32
          %s146 = scalar_lea.hbm %s1, %s145
          %s147 = sshll.u32 %s139, 4
          %s148 = int_to_ptr.vmem [resolvable:$true] %s147
          %153 = dma.hbm_to_vmem [thread:$0]  %s146, 128, %s148, %s136, 32, 32, 2
        $region24: #{tpu_custom_call.1} parent=19 // pred_fallthru
          _
      $region20: #{tpu_custom_call.1} parent=5 // pred_fallthru
        _
      %p154 = scmp.le.s32.totalorder 1, %s15
      %p155 = scmp.lt.s32.totalorder %s15, 3
      %p156 = pnand %p154, %p155
      %p157 = pneg %p156
      // Predicated region
      $region25: #{tpu_custom_call.1} parent=5 // pred_check
        _
      $region26: #{tpu_custom_call.1} parent=5 // pred_check_branch
        %159 = sbr.rel (%p156) target = $region28
      $region27: #{tpu_custom_call.1} parent=5 // pred_region
        %s160 = ssub.s32 %s15, 1
        // Predicated region
        $region29: #{tpu_custom_call.1} parent=27 // pred_check
          %p161 = pneg %p48
        $region30: #{tpu_custom_call.1} parent=27 // pred_check_branch
          %163 = sbr.rel (%p161) target = $region32
        $region31: #{tpu_custom_call.1} parent=27 // pred_region
          %164 = dma.done [#allocation5], 16
        $region32: #{tpu_custom_call.1} parent=27 // pred_fallthru
          _
        %s165 = sand.u32 %s63, 1
        %s166 = scalar_lea.sflag [#allocation3], %s165
        %s167 = sand.u32 %s63, 1
        %s168 = smul.addr %s167, 8
        %s169 = scalar_lea.vmem [#allocation6], %s168
        // Predicated region
        $region33: #{tpu_custom_call.1} parent=27 // pred_check
          %p170 = pneg %p76
        $region34: #{tpu_custom_call.1} parent=27 // pred_check_branch
          %172 = sbr.rel (%p170) target = $region36
        $region35: #{tpu_custom_call.1} parent=27 // pred_region
          %173 = dma.done %s166, 128
        $region36: #{tpu_custom_call.1} parent=27 // pred_fallthru
          _
        %174 = sfence
        %p175 = pneg %p48
        %p176 = pneg %p45
        %s177 = sand.u32 %s63, 1
        %s178 = scalar_lea.sflag [#allocation3], %s177
        %s179 = sand.u32 %s63, 1
        %s180 = smul.addr %s179, 8
        %s181 = scalar_lea.vmem [#allocation6], %s180
        %p182 = pneg %p76
        %p183 = pneg %p73
        %p184 = pneg %p104
        %p185 = pneg %p101
        %s186 = sand.u32 %s91, 1
        %s187 = scalar_lea.sflag [#allocation4], %s186
        %s188 = sand.u32 %s91, 1
        %s189 = smul.addr %s188, 4
        %s190 = scalar_lea.vmem [#allocation7], %s189
        %s191 = smul.u32 %s24, 12
        %v192 = vld [vmem:[%s169] sm:$0x3]
        %s193 = scalar_lea.vmem %s169, 2 [#allocation6]
        %v194 = vld [vmem:[%s193] sm:$0x3]
        %s195 = scalar_lea.vmem %s169, 4 [#allocation6]
        %v196 = vld [vmem:[%s195] sm:$0x3]
        %s197 = scalar_lea.vmem %s169, 6 [#allocation6]
        %v198 = vld [vmem:[%s197] sm:$0x3]
        %s199 = sld [smem:[#allocation2 + %s191]]
        %v200 = vstv %s199
        %v201 = vmul.f32 %v200, %v192
        %s202 = sadd.s32 %s191, 1
        %s203 = sld [smem:[#allocation2 + %s202]]
        %v204 = vstv %s203
        %v205 = vmul.f32 %v204, %v194
        %v206 = vadd.f32 %v201, %v205
        %s207 = sadd.s32 %s191, 2
        %s208 = sld [smem:[#allocation2 + %s207]]
        %v209 = vstv %s208
        %v210 = vmul.f32 %v209, %v196
        %v211 = vadd.f32 %v206, %v210
        %s212 = sadd.s32 %s191, 3
        %s213 = sld [smem:[#allocation2 + %s212]]
        %v214 = vstv %s213
        %v215 = vmul.f32 %v214, %v198
        %v216 = vadd.f32 %v211, %v215
        %s217 = sadd.s32 %s191, 4
        %s218 = sld [smem:[#allocation2 + %s217]]
        %v219 = vstv %s218
        %v220 = vmul.f32 %v219, %v192
        %s221 = sadd.s32 %s191, 5
        %s222 = sld [smem:[#allocation2 + %s221]]
        %v223 = vstv %s222
        %v224 = vmul.f32 %v223, %v194
        %v225 = vadd.f32 %v220, %v224
        %s226 = sadd.s32 %s191, 6
        %s227 = sld [smem:[#allocation2 + %s226]]
        %v228 = vstv %s227
        %v229 = vmul.f32 %v228, %v196
        %v230 = vadd.f32 %v225, %v229
        %s231 = sadd.s32 %s191, 7
        %s232 = sld [smem:[#allocation2 + %s231]]
        %v233 = vstv %s232
        %v234 = vmul.f32 %v233, %v198
        %v235 = vadd.f32 %v230, %v234
        %s236 = sadd.s32 %s191, 8
        %s237 = sld [smem:[#allocation2 + %s236]]
        %v238 = vstv %s237
        %v239 = vmul.f32 %v238, %v192
        %s240 = sadd.s32 %s191, 9
        %s241 = sld [smem:[#allocation2 + %s240]]
        %v242 = vstv %s241
        %v243 = vmul.f32 %v242, %v194
        %v244 = vadd.f32 %v239, %v243
        %s245 = sadd.s32 %s191, 10
        %s246 = sld [smem:[#allocation2 + %s245]]
        %v247 = vstv %s246
        %v248 = vmul.f32 %v247, %v196
        %v249 = vadd.f32 %v244, %v248
        %s250 = sadd.s32 %s191, 11
        %s251 = sld [smem:[#allocation2 + %s250]]
        %v252 = vstv %s251
        %v253 = vmul.f32 %v252, %v198
        %v254 = vadd.f32 %v249, %v253
        %v255 = vadd.f32 %v254, 1e-07
        %v256 = vrcp.pop %v255
        %v257 = vmul.f32 %v255, %v256
        %v258 = vsub.f32 2.0, %v257
        %v259 = vmul.f32 %v256, %v258
        %v260 = vmul.f32 %v216, %v259
        %v261 = vsub.f32 %v260, 1.0
        %262 = vst [vmem:[%s190] sm:$0x3] %v261
        %v263 = vmul.f32 %v235, %v259
        %v264 = vsub.f32 %v263, 1.0
        %s265 = scalar_lea.vmem %s190, 2 [#allocation7]
        %266 = vst [vmem:[%s265] sm:$0x3] %v264
        %s267 = sand.u32 %s91, 1
        %s268 = scalar_lea.sflag [#allocation4], %s267
        %s269 = sand.u32 %s91, 1
        %s270 = smul.addr %s269, 4
        %s271 = scalar_lea.vmem [#allocation7], %s270
        // Predicated region
        $region37: #{tpu_custom_call.1} parent=27 // pred_check
          %p272 = pneg %p101
        $region38: #{tpu_custom_call.1} parent=27 // pred_check_branch
          %274 = sbr.rel (%p272) target = $region40
        $region39: #{tpu_custom_call.1} parent=27 // pred_region
          %s276 = ssub.s32 64, 64
          %277 = vsyncadd %s268, %s276
          %s278 = smul.addr %s24, 2
          %s279 = sadd.s32 %s25, %s278
          %s280 = smul.addr %s279, 32
          %s281 = scalar_lea.hbm %s2, %s280
          %s282 = sshll.u32 %s271, 4
          %s283 = int_to_ptr.vmem [resolvable:$true] %s282
          %288 = dma.vmem_to_hbm [thread:$0]  %s283, 64, %s281, %s268, 32, 32, 2
        $region40: #{tpu_custom_call.1} parent=27 // pred_fallthru
          _
      $region28: #{tpu_custom_call.1} parent=5 // pred_fallthru
        _
      %p289 = scmp.le.s32.totalorder 2, %s15
      // Predicated region
      $region41: #{tpu_custom_call.1} parent=5 // pred_check
        %p290 = pneg %p289
      $region42: #{tpu_custom_call.1} parent=5 // pred_check_branch
        %292 = sbr.rel (%p290) target = $region44
      $region43: #{tpu_custom_call.1} parent=5 // pred_region
        %s293 = ssub.s32 %s15, 2
        // Predicated region
        $region45: #{tpu_custom_call.1} parent=43 // pred_check
          %p294 = pneg %p107
        $region46: #{tpu_custom_call.1} parent=43 // pred_check_branch
          %296 = sbr.rel (%p294) target = $region48
        $region47: #{tpu_custom_call.1} parent=43 // pred_region
          %s297 = sand.u32 %s92, 1
          %s298 = scalar_lea.sflag [#allocation4], %s297
          %s299 = sand.u32 %s92, 1
          %s300 = smul.addr %s299, 4
          %s301 = scalar_lea.vmem [#allocation7], %s300
          %302 = dma.done %s298, 64
        $region48: #{tpu_custom_call.1} parent=43 // pred_fallthru
          _
      $region44: #{tpu_custom_call.1} parent=5 // pred_fallthru
        _
    $region6: #{tpu_custom_call.1} parent=1 // loop_footer
      %s19 = sadd.s32 1, %s15
    $region7: #{tpu_custom_call.1} parent=1 // loop_footer_branch
      %14 = sbr.rel target = $region3
    $region8: #{tpu_custom_call.1} parent=1 // loop_exit
      _
    %303 = vsyncpa [#allocation3], 1
    %s304 = scalar_lea.sflag [#allocation3], 1
    %305 = vsyncpa %s304, 1
    %306 = vsyncpa [#allocation4], 1
    %s307 = scalar_lea.sflag [#allocation4], 1
    %308 = vsyncpa %s307, 1
    %309 = vsyncpa [#allocation5], 1
    %s310 = scalar_lea.sflag [#allocation5], 1
    %311 = vsyncpa %s310, 1

</llo_original>
